<compile_context>
chip_gen: v6e
topology: v6e:2x2x1
jax: 0.10.0
libtpu: 0.0.40
codegen_flags: <defaults>
</compile_context>

<pallas_src>
import math

import jax
import jax.numpy as jnp
import numpy as np
from jax.experimental import pallas as pl
from jax.experimental.pallas import tpu as pltpu


# --------------------------- kernels ---------------------------------------

def _gate_kernel(tre_ref, tim_ref, pre_ref, pim_ref, wt_ref, b_ref, gate_ref):
    # Re(text * select_para) for all batches at once: (B, S, C).  The imaginary
    # part is discarded by the reference (AvgPool1d is applied to .real).
    prod = tre_ref[...] * pre_ref[...] - tim_ref[...] * pim_ref[...]
    pooled = jnp.mean(prod, axis=1)                                   # (B, C)
    # Conv1d(C, C, kernel_size=1) on a length-1 sequence == dense over channels.
    gate_ref[...] = (jnp.dot(pooled, wt_ref[...],
                             preferred_element_type=jnp.float32)
                     + b_ref[...])                                    # (B, C)


def _apply_gate_kernel(gate_ref, img_ref, out_ref):
    # gate row (1, K) broadcast over (tn, K) interleaved image rows (pure VPU).
    out_ref[0] = img_ref[0] * gate_ref[0]


# --------------------------- helpers ----------------------------------------

def _hw_block_config():
    """(target block bytes, scoped-VMEM limit) per TPU generation."""
    try:
        vmem = int(pltpu.get_tpu_info().vmem_capacity_bytes)
    except Exception:
        vmem = 64 * 1024 * 1024                       # assume smallest (v7x)
    if vmem >= 96 * 1024 * 1024:                      # v5e / v6e: 128 MiB VMEM
        return 4 * 1024 * 1024, 64 * 1024 * 1024
    return 2 * 1024 * 1024, 32 * 1024 * 1024          # v7x: 64 MiB VMEM


def _pick_row_tile(nk, row_bytes, target_bytes):
    """Row tile: multiple of 8, block <= ~target_bytes; never falls back to the
    whole plane unless it already fits.  Prefers divisors of nk (no ragged
    tail); otherwise the grid uses pl.cdiv and Pallas masks the last block."""
    if nk <= 8:
        return nk
    cap = min(nk, max(8, target_bytes // max(row_bytes, 1)))
    cap = max(8, (cap // 8) * 8)
    for t in range(cap, 7, -8):
        if nk % t == 0:
            return t
    return cap


def _text_gate(text, select_para, conv_w, conv_b):
    """Text2ImageGate, single-step Pallas call over all batches (tiny)."""
    B, S, C = text.shape
    tre = jnp.real(text).astype(jnp.float32)
    tim = jnp.imag(text).astype(jnp.float32)
    # Pre-broadcast the (S, C) params to (B, S, C) outside the kernel (tiny).
    pre = jnp.broadcast_to(select_para[..., 0], (B, S, C))
    pim = jnp.broadcast_to(select_para[..., 1], (B, S, C))
    wt = conv_w.T                       # kernel computes pooled @ wt
    bias = conv_b.reshape(1, C)
    return pl.pallas_call(
        _gate_kernel,
        out_shape=jax.ShapeDtypeStruct((B, C), jnp.float32),
    )(tre, tim, pre, pim, wt, bias)


# --------------------------- public entry points ----------------------------

@jax.jit
def image_frequency_selection(image_ri, text, select_para, conv_w, conv_b):
    """Hot-path entry point (interleaved layout, minimum HBM traffic).

    image_ri:    float32 (B, N, C, 2)   re/im interleaved frequency image
    text:        complex64 (B, S, C)
    select_para: float32 (S, C, 2)
    conv_w:      float32 (C, C)
    conv_b:      float32 (C,)
    Returns float32 (B, N, C, 2) in the same interleaved layout.
    """
    B, N, C, _ = image_ri.shape

    gate = _text_gate(text, select_para, conv_w, conv_b)          # (B, C)

    # Lane densification: group k rows so the lane dim K = k*2C is a multiple
    # of 128.  The regrouping reshape of the contiguous buffer is a pure
    # bitcast (no HBM copy).
    two_c = 2 * C
    k0 = 128 // math.gcd(two_c, 128)
    if N % k0 == 0:
        k = k0
    else:
        k = 1
        # TODO(synk): when N % k0 != 0 the lane width falls back to 2C (possibly
        # <128 -> masked stores); pad N to a multiple of k0 at the producer.
    K = k * two_c
    Nk = N // k
    img = image_ri.reshape(B, Nk, K)

    # Expand the real gate to the interleaved + grouped layout: repeat(2) so
    # re/im of a channel share one gate value, then tile across the k grouped
    # original rows.
    gate_row = jnp.tile(jnp.repeat(gate, 2, axis=-1), (1, k)).reshape(B, 1, K)

    target_bytes, vmem_limit = _hw_block_config()
    tn = _pick_row_tile(Nk, K * 4, target_bytes)
    grid_n = pl.cdiv(Nk, tn)
    # Keep both v7x TensorCores busy for tiny batches.
    if B * grid_n < 2 and Nk > 8:
        half = (((Nk + 1) // 2 + 7) // 8) * 8
        if half < Nk:
            tn = half
            grid_n = pl.cdiv(Nk, tn)

    out = pl.pallas_call(
        _apply_gate_kernel,
        out_shape=jax.ShapeDtypeStruct((B, Nk, K), jnp.float32),
        grid_spec=pltpu.PrefetchScalarGridSpec(
            num_scalar_prefetch=0,
            grid=(B, grid_n),
            in_specs=[
                pl.BlockSpec((1, 1, K), lambda b, n: (b, 0, 0)),    # gate row
                pl.BlockSpec((1, tn, K), lambda b, n: (b, n, 0)),   # image rows
            ],
            out_specs=pl.BlockSpec((1, tn, K), lambda b, n: (b, n, 0)),
        ),
        compiler_params=pltpu.CompilerParams(
            dimension_semantics=("parallel", "parallel"),
            vmem_limit_bytes=vmem_limit),
    )(gate_row, img)

    return out.reshape(B, N, C, 2)


@jax.jit
def image_frequency_selection_complex(image, text, select_para, conv_w, conv_b):
    """Convenience complex64 boundary (adds one pack + one unpack HBM pass over
    the image; prefer the interleaved-f32 entry point on the hot path)."""
    img_ri = jnp.stack([jnp.real(image), jnp.imag(image)],
                       axis=-1).astype(jnp.float32)
    out = image_frequency_selection(img_ri, text, select_para, conv_w, conv_b)
    return jax.lax.complex(out[..., 0], out[..., 1]).astype(jnp.complex64)


# --------------------------- reference & test --------------------------------

def reference(image, text, select_para, conv_w, conv_b):
    """Pure-JAX mirror of the PyTorch forward, for verification."""
    p = select_para[..., 0] + 1j * select_para[..., 1]        # (S, C) complex
    t = text * p                                              # (B, S, C) complex
    pooled = jnp.mean(jnp.real(t), axis=1)                    # permute + AvgPool1d(S)
    gate = pooled @ conv_w.T + conv_b                         # Conv1d kernel=1
    return image * gate[:, None, :]                           # (B, N, C) complex


if __name__ == "__main__":
    B, S, C = 2, 8, 32          # batch, text length s, d_model
    H = W = 16
    N = H * W                   # image frequency positions

    key = jax.random.PRNGKey(0)
    k_tr, k_ti, k_img, k_p, k_w, k_b = jax.random.split(key, 6)

    text = jax.lax.complex(
        jax.random.normal(k_tr, (B, S, C), jnp.float32),
        jax.random.normal(k_ti, (B, S, C), jnp.float32)).astype(jnp.complex64)
    # Frequency image kept in the interleaved float32 layout (re/im last axis),
    # as the surrounding model should on the hot path.
    image_ri = jax.random.normal(k_img, (B, N, C, 2), jnp.float32)

    # Deterministic, in-script parameter init (matches the module's shapes).
    select_para = jax.random.normal(k_p, (S, C, 2), jnp.float32)      # randn(s, d, 2)
    bound = 1.0 / np.sqrt(C)                                          # Conv1d-style init
    conv_w = jax.random.uniform(k_w, (C, C), jnp.float32, -bound, bound)
    conv_b = jax.random.uniform(k_b, (C,), jnp.float32, -bound, bound)

    # Hot path (interleaved layout).
    out_ri = image_frequency_selection(image_ri, text, select_para, conv_w, conv_b)
    out_ri = jax.block_until_ready(out_ri)

    # Convenience complex64 boundary.
    image_c = jax.lax.complex(image_ri[..., 0], image_ri[..., 1]).astype(jnp.complex64)
    out_c = image_frequency_selection_complex(image_c, text, select_para, conv_w, conv_b)
    out_c = jax.block_until_ready(out_c)

    ref_c = reference(image_c, text, select_para, conv_w, conv_b)
    ref_ri = jnp.stack([jnp.real(ref_c), jnp.imag(ref_c)], axis=-1)

    np.testing.assert_allclose(np.asarray(out_ri), np.asarray(ref_ri),
                               rtol=1e-4, atol=1e-4)
    np.testing.assert_allclose(np.asarray(out_c), np.asarray(ref_c),
                               rtol=1e-4, atol=1e-4)
    print("KERNEL_OK")
</pallas_src>

<mosaic_0001>
module attributes {stable_mosaic.version = 11 : i64} {
  func.func @_gate_kernel(%arg0: memref<2x8x32xf32, #tpu.memory_space<vmem>>, %arg1: memref<2x8x32xf32, #tpu.memory_space<vmem>>, %arg2: memref<2x8x32xf32, #tpu.memory_space<vmem>>, %arg3: memref<2x8x32xf32, #tpu.memory_space<vmem>>, %arg4: memref<32x32xf32, #tpu.memory_space<vmem>>, %arg5: memref<1x32xf32, #tpu.memory_space<vmem>>, %arg6: memref<2x32xf32, #tpu.memory_space<vmem>>) attributes {dimension_semantics = [], scalar_prefetch = 0 : i64, scratch_operands = 0 : i64, tpu.core_type = #tpu.core_type<tc>} {
    %c0 = arith.constant 0 : index
    %c0_0 = arith.constant 0 : index
    %c0_1 = arith.constant 0 : index
    %0 = vector.load %arg0[%c0, %c0_0, %c0_1] : memref<2x8x32xf32, #tpu.memory_space<vmem>>, vector<2x8x32xf32>
    %c0_2 = arith.constant 0 : index
    %c0_3 = arith.constant 0 : index
    %c0_4 = arith.constant 0 : index
    %1 = vector.load %arg2[%c0_2, %c0_3, %c0_4] : memref<2x8x32xf32, #tpu.memory_space<vmem>>, vector<2x8x32xf32>
    %2 = arith.mulf %0, %1 : vector<2x8x32xf32>
    %c0_5 = arith.constant 0 : index
    %c0_6 = arith.constant 0 : index
    %c0_7 = arith.constant 0 : index
    %3 = vector.load %arg1[%c0_5, %c0_6, %c0_7] : memref<2x8x32xf32, #tpu.memory_space<vmem>>, vector<2x8x32xf32>
    %c0_8 = arith.constant 0 : index
    %c0_9 = arith.constant 0 : index
    %c0_10 = arith.constant 0 : index
    %4 = vector.load %arg3[%c0_8, %c0_9, %c0_10] : memref<2x8x32xf32, #tpu.memory_space<vmem>>, vector<2x8x32xf32>
    %5 = arith.mulf %3, %4 : vector<2x8x32xf32>
    %6 = arith.subf %2, %5 : vector<2x8x32xf32>
    %cst = arith.constant dense<0.000000e+00> : vector<2x32xf32>
    %7 = vector.multi_reduction <add>, %6, %cst [1] : vector<2x8x32xf32> to vector<2x32xf32>
    %cst_11 = arith.constant 8.000000e+00 : f32
    %8 = vector.broadcast %cst_11 : f32 to vector<2x32xf32>
    %9 = arith.divf %7, %8 : vector<2x32xf32>
    %c0_12 = arith.constant 0 : index
    %c0_13 = arith.constant 0 : index
    %10 = vector.load %arg4[%c0_12, %c0_13] : memref<32x32xf32, #tpu.memory_space<vmem>>, vector<32x32xf32>
    %cst_14 = arith.constant dense<0.000000e+00> : vector<2x32xf32>
    %11 = tpu.matmul %9, %10, %cst_14 {dimension_numbers = #tpu.dot_dimension_numbers<[1], [0], [0], [1], [0, 0, 1, 1], [], []>} : vector<2x32xf32>, vector<32x32xf32>, vector<2x32xf32> -> vector<2x32xf32>
    %c0_15 = arith.constant 0 : index
    %c0_16 = arith.constant 0 : index
    %12 = vector.load %arg5[%c0_15, %c0_16] : memref<1x32xf32, #tpu.memory_space<vmem>>, vector<1x32xf32>
    %13 = vector.broadcast %12 : vector<1x32xf32> to vector<2x32xf32>
    %14 = arith.addf %11, %13 : vector<2x32xf32>
    %c0_17 = arith.constant 0 : index
    %c0_18 = arith.constant 0 : index
    %15 = vector.load %arg6[%c0_17, %c0_18] : memref<2x32xf32, #tpu.memory_space<vmem>>, vector<2x32xf32>
    tpu.vector_store %arg6[%c0_17, %c0_18], %14 {strides = array<i32>} : memref<2x32xf32, #tpu.memory_space<vmem>>, vector<2x32xf32>,
    return
  }
}

module attributes {stable_mosaic.version = 11 : i64} {
  func.func @_apply_gate_kernel(%arg0: i32, %arg1: i32, %arg2: memref<1x1x128xf32, #tpu.memory_space<vmem>>, %arg3: memref<1x128x128xf32, #tpu.memory_space<vmem>>, %arg4: memref<1x128x128xf32, #tpu.memory_space<vmem>>) attributes {dimension_semantics = [#tpu.dimension_semantics<parallel>, #tpu.dimension_semantics<parallel>], iteration_bounds = array<i64: 2, 1>, scalar_prefetch = 0 : i64, scratch_operands = 0 : i64, tpu.core_type = #tpu.core_type<tc>, window_params = [{transform_indices = @transform_0, window_bounds = array<i64: 1, 1, 128>}, {transform_indices = @transform_1, window_bounds = array<i64: 1, 128, 128>}, {transform_indices = @transform_2, window_bounds = array<i64: 1, 128, 128>}]} {
    %c0 = arith.constant 0 : index
    %c0_0 = arith.constant 0 : index
    %c0_1 = arith.constant 0 : index
    %0 = vector.load %arg3[%c0, %c0_0, %c0_1] : memref<1x128x128xf32, #tpu.memory_space<vmem>>, vector<1x128x128xf32>
    %1 = vector.shape_cast %0 : vector<1x128x128xf32> to vector<128x128xf32>
    %c0_2 = arith.constant 0 : index
    %c0_3 = arith.constant 0 : index
    %c0_4 = arith.constant 0 : index
    %2 = vector.load %arg2[%c0_2, %c0_3, %c0_4] : memref<1x1x128xf32, #tpu.memory_space<vmem>>, vector<1x1x128xf32>
    %3 = vector.shape_cast %2 : vector<1x1x128xf32> to vector<1x128xf32>
    %4 = vector.broadcast %3 : vector<1x128xf32> to vector<128x128xf32>
    %5 = arith.mulf %1, %4 : vector<128x128xf32>
    %c0_5 = arith.constant 0 : index
    %c0_6 = arith.constant 0 : index
    %c0_7 = arith.constant 0 : index
    %6 = vector.load %arg4[%c0_5, %c0_6, %c0_7] : memref<1x128x128xf32, #tpu.memory_space<vmem>>, vector<1x128x128xf32>
    %7 = vector.shape_cast %6 : vector<1x128x128xf32> to vector<128x128xf32>
    %8 = vector.shape_cast %5 : vector<128x128xf32> to vector<1x128x128xf32>
    tpu.vector_store %arg4[%c0_5, %c0_6, %c0_7], %8 {strides = array<i32>} : memref<1x128x128xf32, #tpu.memory_space<vmem>>, vector<1x128x128xf32>,
    return
  }
  func.func @transform_0(%arg0: i32, %arg1: i32) -> (i32, i32, i32) {
    %c0_i32 = arith.constant 0 : i32
    %c0_i32_0 = arith.constant 0 : i32
    %c0_i32_1 = arith.constant 0 : i32
    return %arg0, %c0_i32, %c0_i32_0 : i32, i32, i32
  }
  func.func @transform_1(%arg0: i32, %arg1: i32) -> (i32, i32, i32) {
    %c0_i32 = arith.constant 0 : i32
    %c0_i32_0 = arith.constant 0 : i32
    return %arg0, %arg1, %c0_i32 : i32, i32, i32
  }
  func.func @transform_2(%arg0: i32, %arg1: i32) -> (i32, i32, i32) {
    %c0_i32 = arith.constant 0 : i32
    %c0_i32_0 = arith.constant 0 : i32
    return %arg0, %arg1, %c0_i32 : i32, i32, i32
  }
}

</mosaic_0001>

<llo_original>
// kernel: custom-call.1
$region0: #{custom-call.1}
  %s0 = inlined_call_operand.hbm [shape: c64[2,8,32], index: 0, kind: input, shape index: {}]
  %s1 = inlined_call_operand.vmem [shape: f32[2,8,32], index: 1, kind: output, shape index: {}]
  %s2 = scalar_lea.hbm %s0, 256
  $region1: #{custom-call.1} parent=0
    #allocation0 [shape = 's32[1]{0}', space=sflag, size = 0x4, scoped, tag = 'scoped memory for custom-call.1']
    %3 = vsyncpa [#allocation0], 0
    %s4 = sshll.u32 %s1, 4
    %s5 = int_to_ptr.vmem [resolvable:$true] %s4
    %7 = dma.hbm_to_vmem [thread:$0]  %s2, 256, %s5, [#allocation0]
    %8 = dma.done [#allocation0], 256
    %9 = vsyncpa [#allocation0], 1

// kernel: custom-call
$region0: #{custom-call}
  %s0 = inlined_call_operand.hbm [shape: c64[2,8,32], index: 0, kind: input, shape index: {}]
  %s1 = inlined_call_operand.vmem [shape: f32[2,8,32], index: 1, kind: output, shape index: {}]
  $region1: #{custom-call} parent=0
    #allocation0 [shape = 's32[1]{0}', space=sflag, size = 0x4, scoped, tag = 'scoped memory for custom-call']
    %2 = vsyncpa [#allocation0], 0
    %s3 = sshll.u32 %s1, 4
    %s4 = int_to_ptr.vmem [resolvable:$true] %s3
    %6 = dma.hbm_to_vmem [thread:$0]  %s0, 256, %s4, [#allocation0]
    %7 = dma.done [#allocation0], 256
    %8 = vsyncpa [#allocation0], 1

// kernel: image_frequency_selection.3
$region0: #{image_frequency_selection.3}
  #allocation0 [shape = 'u32[]', space=smem, size = 0x4, offset = 0x4, fixed_abs, tag = 'smem constant byte address 0x4 - core index']
  #allocation1 [shape = 'u32[144,128]{1,0:T(1,128)}', space=vmem, size = 0x12000, scoped, tag = 'internal scratch']
  %s0 = inlined_call_operand.vmem [shape: f32[2,1,128], index: 0, kind: input, shape index: {}]
  %s1 = inlined_call_operand.vmem [shape: f32[2,128,128], index: 1, kind: input, shape index: {}]
  %s2 = inlined_call_operand.vmem [shape: f32[2,128,128], index: 2, kind: output, shape index: {}]
  %s3 = sld [smem:[#allocation0]]
  $region41: #{image_frequency_selection.3} parent=0
    _
  %s5 = ssub.s32 1, %s3
  %s6 = scalar_select 0, %s5, %s3
  loop: start=0, step=1, limit=4
  $region2: #{image_frequency_selection.3} parent=0 // loop_pre_header
    _
  $region3: #{image_frequency_selection.3} parent=0 // loop_header
    %s8 = sphi 0, %s12
    %p9 = scmp.ge.s32.totalorder %s8, 4
    %s15 = sphi 0, %s27
    %s16 = sphi 0, %s23
    %s17 = sphi 0, %s15
    %s18 = sphi 0, %s16
    %s19 = sphi 0, %s17
    %s20 = sphi 0, %s18
    %s30 = sphi 0, %s32
    %s33 = sphi 0, %s30
    %s34 = sphi 0, %s33
    %s50 = sphi 0, %s34
    %s58 = sphi 0, %s60
    %s61 = sphi 0, %s58
    %s62 = sphi 0, %s61
    %s78 = sphi 0, %s62
    %s86 = sphi 0, %s88
    %s89 = sphi 0, %s86
    %s90 = sphi 0, %s89
    %s106 = sphi 0, %s90
  $region4: #{image_frequency_selection.3} parent=0 // loop_header_branch
    %11 = sbr.rel (%p9) target = $region8
  $region5: #{image_frequency_selection.3} parent=0 // loop_body
    %s13 = ssub.s32 %s8, 1
    %s14 = ssub.s32 %s8, 2
    %s21 = sadd.s32 1, %s16
    %p22 = scmp.ge.s32.totalorder %s21, 1
    %s23 = scalar_select %p22, 0, %s21
    %s24 = sadd.s32 1, %s15
    %s25 = scalar_select %p22, %s24, %s15
    %p26 = scmp.ge.s32.totalorder %s25, 2
    %s27 = scalar_select %p26, 0, %s25
    %s28 = ssub.s32 %s15, %s27
    %p29 = scmp.eq.s32.totalorder %s28, 0
    %s31 = sadd.s32 %s30, 1
    %s32 = scalar_select %p29, %s30, %s31
    %p35 = pneg %p29
    %p36 = scmp.eq.s32.totalorder %s8, 1
    %p37 = por %p35, %p36
    %p38 = scmp.ne.s32.totalorder %s30, %s33
    %p39 = scmp.eq.s32.totalorder %s8, 0
    %p40 = por %p38, %p39
    %p41 = scmp.ne.s32.totalorder %s30, %s33
    %p42 = scmp.eq.s32.totalorder %s13, 1
    %p43 = por %p41, %p42
    %p44 = scmp.ne.s32.totalorder %s33, %s34
    %p45 = scmp.eq.s32.totalorder %s13, 0
    %p46 = por %p44, %p45
    %p47 = scmp.ne.s32.totalorder %s33, %s34
    %p48 = scmp.eq.s32.totalorder %s14, 1
    %p49 = por %p47, %p48
    %p51 = scmp.ne.s32.totalorder %s34, %s50
    %p52 = scmp.eq.s32.totalorder %s14, 0
    %p53 = por %p51, %p52
    %s54 = ssub.s32 %s15, %s27
    %s55 = ssub.s32 %s16, %s23
    %s56 = sor.u32 %s54, %s55
    %p57 = scmp.eq.s32.totalorder %s56, 0
    %s59 = sadd.s32 %s58, 1
    %s60 = scalar_select %p57, %s58, %s59
    %p63 = pneg %p57
    %p64 = scmp.eq.s32.totalorder %s8, 1
    %p65 = por %p63, %p64
    %p66 = scmp.ne.s32.totalorder %s58, %s61
    %p67 = scmp.eq.s32.totalorder %s8, 0
    %p68 = por %p66, %p67
    %p69 = scmp.ne.s32.totalorder %s58, %s61
    %p70 = scmp.eq.s32.totalorder %s13, 1
    %p71 = por %p69, %p70
    %p72 = scmp.ne.s32.totalorder %s61, %s62
    %p73 = scmp.eq.s32.totalorder %s13, 0
    %p74 = por %p72, %p73
    %p75 = scmp.ne.s32.totalorder %s61, %s62
    %p76 = scmp.eq.s32.totalorder %s14, 1
    %p77 = por %p75, %p76
    %p79 = scmp.ne.s32.totalorder %s62, %s78
    %p80 = scmp.eq.s32.totalorder %s14, 0
    %p81 = por %p79, %p80
    %s82 = ssub.s32 %s15, %s27
    %s83 = ssub.s32 %s16, %s23
    %s84 = sor.u32 %s82, %s83
    %p85 = scmp.eq.s32.totalorder %s84, 0
    %s87 = sadd.s32 %s86, 1
    %s88 = scalar_select %p85, %s86, %s87
    %p91 = pneg %p85
    %p92 = scmp.eq.s32.totalorder %s8, 1
    %p93 = por %p91, %p92
    %p94 = scmp.ne.s32.totalorder %s86, %s89
    %p95 = scmp.eq.s32.totalorder %s8, 0
    %p96 = por %p94, %p95
    %p97 = scmp.ne.s32.totalorder %s86, %s89
    %p98 = scmp.eq.s32.totalorder %s13, 1
    %p99 = por %p97, %p98
    %p100 = scmp.ne.s32.totalorder %s89, %s90
    %p101 = scmp.eq.s32.totalorder %s13, 0
    %p102 = por %p100, %p101
    %p103 = scmp.ne.s32.totalorder %s89, %s90
    %p104 = scmp.eq.s32.totalorder %s14, 1
    %p105 = por %p103, %p104
    %p107 = scmp.ne.s32.totalorder %s90, %s106
    %p108 = scmp.eq.s32.totalorder %s14, 0
    %p109 = por %p107, %p108
    %p110 = scmp.le.s32.totalorder 1, %s8
    %p111 = scmp.lt.s32.totalorder %s8, 3
    %p112 = pnand %p110, %p111
    %p113 = pneg %p112
    // Predicated region
    $region9: #{image_frequency_selection.3} parent=5 // pred_check
      _
    $region10: #{image_frequency_selection.3} parent=5 // pred_check_branch
      %115 = sbr.rel (%p112) target = $region12
    $region11: #{image_frequency_selection.3} parent=5 // pred_region
      %s116 = ssub.s32 %s8, 1
    $region12: #{image_frequency_selection.3} parent=5 // pred_fallthru
      _
    %p117 = scmp.lt.s32.totalorder %s8, 2
    // Predicated region
    $region13: #{image_frequency_selection.3} parent=5 // pred_check
      %p118 = pneg %p117
    $region14: #{image_frequency_selection.3} parent=5 // pred_check_branch
      %120 = sbr.rel (%p118) target = $region16
    $region15: #{image_frequency_selection.3} parent=5 // pred_region
      // Predicated region
      $region17: #{image_frequency_selection.3} parent=15 // pred_check
        %p121 = pneg %p40
      $region18: #{image_frequency_selection.3} parent=15 // pred_check_branch
        %123 = sbr.rel (%p121) target = $region20
      $region19: #{image_frequency_selection.3} parent=15 // pred_region
        %p124 = scmp.lt.s32.totalorder %s15, 1
        %s125 = scalar_select %p124, %s15, 1
        %s126 = scalar_lea.vmem %s0, %s125
      $region20: #{image_frequency_selection.3} parent=15 // pred_fallthru
        _
      // Predicated region
      $region21: #{image_frequency_selection.3} parent=15 // pred_check
        %p127 = pneg %p68
      $region22: #{image_frequency_selection.3} parent=15 // pred_check_branch
        %129 = sbr.rel (%p127) target = $region24
      $region23: #{image_frequency_selection.3} parent=15 // pred_region
        %s130 = smul.u32 16, %s16
        %p131 = scmp.lt.s32.totalorder %s15, 1
        %s132 = scalar_select %p131, %s15, 1
        %p133 = scmp.lt.s32.totalorder %s130, 15
        %s134 = scalar_select %p133, %s130, 15
        %s135 = smul.addr %s132, 16
        %s136 = sadd.s32 %s134, %s135
        %s137 = smul.addr %s136, 8
        %s138 = scalar_lea.vmem %s1, %s137
        %s139 = smul.u32 16, %s16
      $region24: #{image_frequency_selection.3} parent=15 // pred_fallthru
        _
    $region16: #{image_frequency_selection.3} parent=5 // pred_fallthru
      _
    %p140 = scmp.le.s32.totalorder 1, %s8
    %p141 = scmp.lt.s32.totalorder %s8, 3
    %p142 = pnand %p140, %p141
    %p143 = pneg %p142
    // Predicated region
    $region25: #{image_frequency_selection.3} parent=5 // pred_check
      _
    $region26: #{image_frequency_selection.3} parent=5 // pred_check_branch
      %145 = sbr.rel (%p142) target = $region28
    $region27: #{image_frequency_selection.3} parent=5 // pred_region
      %s146 = ssub.s32 %s8, 1
      %p147 = scmp.lt.s32.totalorder %s17, 1
      %s148 = scalar_select %p147, %s17, 1
      %s149 = scalar_lea.vmem %s0, %s148
      %p150 = pneg %p46
      %p151 = pneg %p43
      %s152 = smul.u32 16, %s18
      %p153 = scmp.lt.s32.totalorder %s17, 1
      %s154 = scalar_select %p153, %s17, 1
      %p155 = scmp.lt.s32.totalorder %s152, 15
      %s156 = scalar_select %p155, %s152, 15
      %s157 = smul.addr %s154, 16
      %s158 = sadd.s32 %s156, %s157
      %s159 = smul.addr %s158, 8
      %s160 = scalar_lea.vmem %s1, %s159
      %p161 = pneg %p74
      %p162 = pneg %p71
      %p163 = pneg %p102
      %p164 = pneg %p99
      %s165 = smul.u32 16, %s18
      %p166 = scmp.lt.s32.totalorder %s17, 1
      %s167 = scalar_select %p166, %s17, 1
      %p168 = scmp.lt.s32.totalorder %s165, 15
      %s169 = scalar_select %p168, %s165, 15
      %s170 = smul.addr %s167, 16
      %s171 = sadd.s32 %s169, %s170
      %s172 = smul.addr %s171, 8
      %s173 = scalar_lea.vmem %s2, %s172
      %p174 = scmp.lt.s32.totalorder %s17, 1
      %s175 = scalar_select %p174, %s17, 1
      %s176 = scalar_lea.vmem %s0, %s175
      %s177 = smul.u32 16, %s18
      %p178 = scmp.lt.s32.totalorder %s17, 1
      %s179 = scalar_select %p178, %s17, 1
      %p180 = scmp.lt.s32.totalorder %s177, 15
      %s181 = scalar_select %p180, %s177, 15
      %s182 = smul.addr %s179, 16
      %s183 = sadd.s32 %s181, %s182
      %s184 = smul.addr %s183, 8
      %s185 = scalar_lea.vmem %s1, %s184
      %s186 = smul.u32 16, %s18
      %s187 = smul.u32 16, %s18
      %p188 = scmp.lt.s32.totalorder %s17, 1
      %s189 = scalar_select %p188, %s17, 1
      %p190 = scmp.lt.s32.totalorder %s187, 15
      %s191 = scalar_select %p190, %s187, 15
      %s192 = smul.addr %s189, 16
      %s193 = sadd.s32 %s191, %s192
      %s194 = smul.addr %s193, 8
      %s195 = scalar_lea.vmem %s2, %s194
      %s196 = smul.u32 16, %s18
      %v197 = vld [vmem:[%s185] sm:$0xff]
      %v198 = vld [vmem:[%s185 + $0x8] sm:$0xff]
      %v199 = vld [vmem:[%s185 + $0x10] sm:$0xff]
      %v200 = vld [vmem:[%s185 + $0x18] sm:$0xff]
      %v201 = vld [vmem:[%s185 + $0x20] sm:$0xff]
      %v202 = vld [vmem:[%s185 + $0x28] sm:$0xff]
      %v203 = vld [vmem:[%s185 + $0x30] sm:$0xff]
      %v204 = vld [vmem:[%s185 + $0x38] sm:$0xff]
      %v205 = vld [vmem:[%s185 + $0x40] sm:$0xff]
      %v206 = vld [vmem:[%s185 + $0x48] sm:$0xff]
      %v207 = vld [vmem:[%s185 + $0x50] sm:$0xff]
      %v208 = vld [vmem:[%s185 + $0x58] sm:$0xff]
      %v209 = vld [vmem:[%s185 + $0x60] sm:$0xff]
      %v210 = vld [vmem:[%s185 + $0x68] sm:$0xff]
      %v211 = vld [vmem:[%s185 + $0x70] sm:$0xff]
      %v212 = vld [vmem:[%s185 + $0x78] sm:$0xff]
      %v213 = vld [vmem:[%s176] sm:$0x1]
      %v215 = vlaneseq
      %v216 = vshrl.u32 %v215, 7
      %v217 = vsub.s32 0, %v216
      %v218 = vrot.slane %v213, %v217
      %v220 = vmul.f32 %v197, %v218
      %v221 = vmul.f32 %v198, %v218
      %v222 = vmul.f32 %v199, %v218
      %v223 = vmul.f32 %v200, %v218
      %v224 = vmul.f32 %v201, %v218
      %v225 = vmul.f32 %v202, %v218
      %v226 = vmul.f32 %v203, %v218
      %v227 = vmul.f32 %v204, %v218
      %v228 = vmul.f32 %v205, %v218
      %v229 = vmul.f32 %v206, %v218
      %v230 = vmul.f32 %v207, %v218
      %v231 = vmul.f32 %v208, %v218
      %v232 = vmul.f32 %v209, %v218
      %v233 = vmul.f32 %v210, %v218
      %v234 = vmul.f32 %v211, %v218
      %v235 = vmul.f32 %v212, %v218
      %236 = vst [vmem:[%s195] sm:$0xff] %v220
      %237 = vst [vmem:[%s195 + $0x8] sm:$0xff] %v221
      %238 = vst [vmem:[%s195 + $0x10] sm:$0xff] %v222
      %239 = vst [vmem:[%s195 + $0x18] sm:$0xff] %v223
      %240 = vst [vmem:[%s195 + $0x20] sm:$0xff] %v224
      %241 = vst [vmem:[%s195 + $0x28] sm:$0xff] %v225
      %242 = vst [vmem:[%s195 + $0x30] sm:$0xff] %v226
      %243 = vst [vmem:[%s195 + $0x38] sm:$0xff] %v227
      %244 = vst [vmem:[%s195 + $0x40] sm:$0xff] %v228
      %245 = vst [vmem:[%s195 + $0x48] sm:$0xff] %v229
      %246 = vst [vmem:[%s195 + $0x50] sm:$0xff] %v230
      %247 = vst [vmem:[%s195 + $0x58] sm:$0xff] %v231
      %248 = vst [vmem:[%s195 + $0x60] sm:$0xff] %v232
      %249 = vst [vmem:[%s195 + $0x68] sm:$0xff] %v233
      %250 = vst [vmem:[%s195 + $0x70] sm:$0xff] %v234
      %251 = vst [vmem:[%s195 + $0x78] sm:$0xff] %v235
      %s252 = smul.u32 16, %s18
      %p253 = scmp.lt.s32.totalorder %s17, 1
      %s254 = scalar_select %p253, %s17, 1
      %p255 = scmp.lt.s32.totalorder %s252, 15
      %s256 = scalar_select %p255, %s252, 15
      %s257 = smul.addr %s254, 16
      %s258 = sadd.s32 %s256, %s257
      %s259 = smul.addr %s258, 8
      %s260 = scalar_lea.vmem %s2, %s259
      // Predicated region
      $region29: #{image_frequency_selection.3} parent=27 // pred_check
        %p261 = pneg %p99
      $region30: #{image_frequency_selection.3} parent=27 // pred_check_branch
        %263 = sbr.rel (%p261) target = $region32
      $region31: #{image_frequency_selection.3} parent=27 // pred_region
        %s264 = smul.u32 16, %s18
      $region32: #{image_frequency_selection.3} parent=27 // pred_fallthru
        _
    $region28: #{image_frequency_selection.3} parent=5 // pred_fallthru
      _
    %p265 = scmp.le.s32.totalorder 2, %s8
    // Predicated region
    $region33: #{image_frequency_selection.3} parent=5 // pred_check
      %p266 = pneg %p265
    $region34: #{image_frequency_selection.3} parent=5 // pred_check_branch
      %268 = sbr.rel (%p266) target = $region36
    $region35: #{image_frequency_selection.3} parent=5 // pred_region
      %s269 = ssub.s32 %s8, 2
      // Predicated region
      $region37: #{image_frequency_selection.3} parent=35 // pred_check
        %p270 = pneg %p105
      $region38: #{image_frequency_selection.3} parent=35 // pred_check_branch
        %272 = sbr.rel (%p270) target = $region40
      $region39: #{image_frequency_selection.3} parent=35 // pred_region
        %s273 = smul.u32 16, %s20
        %p274 = scmp.lt.s32.totalorder %s19, 1
        %s275 = scalar_select %p274, %s19, 1
        %p276 = scmp.lt.s32.totalorder %s273, 15
        %s277 = scalar_select %p276, %s273, 15
        %s278 = smul.addr %s275, 16
        %s279 = sadd.s32 %s277, %s278
        %s280 = smul.addr %s279, 8
        %s281 = scalar_lea.vmem %s2, %s280
      $region40: #{image_frequency_selection.3} parent=35 // pred_fallthru
        _
    $region36: #{image_frequency_selection.3} parent=5 // pred_fallthru
      _
  $region6: #{image_frequency_selection.3} parent=0 // loop_footer
    %s12 = sadd.s32 1, %s8
  $region7: #{image_frequency_selection.3} parent=0 // loop_footer_branch
    %7 = sbr.rel target = $region3
  $region8: #{image_frequency_selection.3} parent=0 // loop_exit
    _

// kernel: image_frequency_selection.2
$region0: #{image_frequency_selection.2}
  #allocation0 [shape = 'u32[]', space=smem, size = 0x4, offset = 0x4, fixed_abs, tag = 'smem constant byte address 0x4 - core index']
  #allocation1 [shape = 'u32[144,128]{1,0:T(1,128)}', space=vmem, size = 0x12000, scoped, tag = 'internal scratch']
  %s0 = inlined_call_operand.vmem [shape: f32[2,8,32], index: 0, kind: input, shape index: {}]
  %s1 = inlined_call_operand.vmem [shape: f32[2,8,32], index: 1, kind: input, shape index: {}]
  %s2 = inlined_call_operand.vmem [shape: f32[2,8,32], index: 2, kind: input, shape index: {}]
  %s3 = inlined_call_operand.vmem [shape: f32[2,8,32], index: 3, kind: input, shape index: {}]
  %s4 = inlined_call_operand.vmem [shape: f32[32,32], index: 4, kind: input, shape index: {}]
  %s5 = inlined_call_operand.hbm [shape: f32[1,32], index: 5, kind: input, shape index: {}]
  %s6 = inlined_call_operand.vmem [shape: f32[2,32], index: 6, kind: output, shape index: {}]
  %s7 = sld [smem:[#allocation0]]
  $region38: #{image_frequency_selection.2} parent=0
    _
  %s9 = ssub.s32 1, %s7
  %s10 = scalar_select 0, %s9, %s7
  $region1: #{image_frequency_selection.2} parent=0
    #allocation2 [shape = 'u8[512]{0}', space=vmem, size = 0x400, scoped, tag = 'input window, operand 5, single buffered']
    #allocation3 [shape = 's32[1]{0}', space=sflag, size = 0x4, scoped, tag = 'scoped memory for image_frequency_selection.2']
    %11 = vsyncpa [#allocation3], 0
    // Predicated region
    $region2: #{image_frequency_selection.2} parent=1 // pred_check
      _
    $region3: #{image_frequency_selection.2} parent=1 // pred_check_branch
      %13 = sbr.rel (0) target = $region5
    $region4: #{image_frequency_selection.2} parent=1 // pred_region
      _
    $region5: #{image_frequency_selection.2} parent=1 // pred_fallthru
      _
    // Predicated region
    $region6: #{image_frequency_selection.2} parent=1 // pred_check
      _
    $region7: #{image_frequency_selection.2} parent=1 // pred_check_branch
      %15 = sbr.rel (0) target = $region9
    $region8: #{image_frequency_selection.2} parent=1 // pred_region
      _
    $region9: #{image_frequency_selection.2} parent=1 // pred_fallthru
      _
    // Predicated region
    $region10: #{image_frequency_selection.2} parent=1 // pred_check
      _
    $region11: #{image_frequency_selection.2} parent=1 // pred_check_branch
      %17 = sbr.rel (0) target = $region13
    $region12: #{image_frequency_selection.2} parent=1 // pred_region
      _
    $region13: #{image_frequency_selection.2} parent=1 // pred_fallthru
      _
    // Predicated region
    $region14: #{image_frequency_selection.2} parent=1 // pred_check
      _
    $region15: #{image_frequency_selection.2} parent=1 // pred_check_branch
      %19 = sbr.rel (0) target = $region17
    $region16: #{image_frequency_selection.2} parent=1 // pred_region
      _
    $region17: #{image_frequency_selection.2} parent=1 // pred_fallthru
      _
    // Predicated region
    $region18: #{image_frequency_selection.2} parent=1 // pred_check
      _
    $region19: #{image_frequency_selection.2} parent=1 // pred_check_branch
      %21 = sbr.rel (0) target = $region21
    $region20: #{image_frequency_selection.2} parent=1 // pred_region
      _
    $region21: #{image_frequency_selection.2} parent=1 // pred_fallthru
      _
    // Predicated region
    $region22: #{image_frequency_selection.2} parent=1 // pred_check
      _
    $region23: #{image_frequency_selection.2} parent=1 // pred_check_branch
      %23 = sbr.rel (0) target = $region25
    $region24: #{image_frequency_selection.2} parent=1 // pred_region
      %s25 = ssub.s32 16, 16
      %26 = vsyncadd [#allocation3], %s25
      %s28 = sshll.u32 [#allocation2], 4
      %s29 = int_to_ptr.vmem [resolvable:$true] %s28
      %31 = dma.hbm_to_vmem [thread:$0]  %s5, 16, %s29, [#allocation3]
    $region25: #{image_frequency_selection.2} parent=1 // pred_fallthru
      _
    // Predicated region
    $region26: #{image_frequency_selection.2} parent=1 // pred_check
      _
    $region27: #{image_frequency_selection.2} parent=1 // pred_check_branch
      %33 = sbr.rel (0) target = $region29
    $region28: #{image_frequency_selection.2} parent=1 // pred_region
      %34 = dma.done [#allocation3], 16
    $region29: #{image_frequency_selection.2} parent=1 // pred_fallthru
      _
    %v35 = vld [vmem:[%s0] sm:$0xff]
    %v36 = vld [vmem:[%s0 + $0x8] sm:$0xff]
    %v37 = vld [vmem:[%s2] sm:$0xff]
    %v38 = vld [vmem:[%s2 + $0x8] sm:$0xff]
    %v39 = vmul.f32 %v35, %v37
    %v40 = vmul.f32 %v36, %v38
    %v41 = vld [vmem:[%s1] sm:$0xff]
    %v42 = vld [vmem:[%s1 + $0x8] sm:$0xff]
    %v43 = vld [vmem:[%s3] sm:$0xff]
    %v44 = vld [vmem:[%s3 + $0x8] sm:$0xff]
    %v45 = vmul.f32 %v41, %v43
    %v46 = vmul.f32 %v42, %v44
    %v47 = vsub.f32 %v39, %v45
    %v48 = vsub.f32 %v40, %v46
    %vm49 = vcmask 261120
    %v50 = vsel %vm49, %v47, 0.0
    %v51 = vrot.slane %v50, 4
    %v52 = vadd.f32 %v50, %v51
    %v53 = vrot.slane %v52, 2
    %v54 = vadd.f32 %v52, %v53
    %v55 = vrot.slane %v54, 1
    %v56 = vadd.f32 %v54, %v55
    %v57 = vsel %vm49, %v48, 0.0
    %v58 = vrot.slane %v57, 4
    %v59 = vadd.f32 %v57, %v58
    %v60 = vrot.slane %v59, 2
    %v61 = vadd.f32 %v59, %v60
    %v62 = vrot.slane %v61, 1
    %v63 = vadd.f32 %v61, %v62
    %v64 = vrcp.pop 8.0
    %v65 = vmul.f32 %v56, %v64
    %v66 = vmul.f32 %v63, %v64
    %v67 = vld [vmem:[%s4] sm:$0xff]
    %v68 = vld [vmem:[%s4 + $0x8] sm:$0xff]
    %v69 = vld [vmem:[%s4 + $0x10] sm:$0xff]
    %v70 = vld [vmem:[%s4 + $0x18] sm:$0xff]
    %v71 = vld [vmem:[#allocation2] sm:$0x1]
    %v73 = vlaneseq
    %v74 = vshrl.u32 %v73, 7
    %v75 = vsub.s32 0, %v74
    %v76 = vrot.slane %v71, %v75
    %vm80 = vcmask 1041409
    %v81 = vsel %vm80, %v66, %v65
    %v82 = vsel %vm49, %v81, 0
    %84 = vmatprep.subr.mxu0 0.0
    %85 = vmatpush1.msra.mxu0 0.0
    %86 = vmatprep.subr.mxu0 0.0
    %87 = vmatpush1.msra.mxu0 0.0
    %88 = vmatprep.subr.mxu0 0.0
    %89 = vmatpush1.msra.mxu0 0.0
    %90 = vmatprep.subr.mxu0 0.0
    %91 = vmatpush1.msra.mxu0 0.0
    %92 = vmatprep.subr.mxu0 0.0
    %93 = vmatpush1.msra.mxu0 0.0
    %94 = vmatprep.subr.mxu0 0.0
    %95 = vmatpush1.msra.mxu0 0.0
    %96 = vmatprep.subr.mxu0 0.0
    %97 = vmatpush1.msra.mxu0 0.0
    %98 = vmatprep.subr.mxu0 0.0
    %99 = vmatpush1.msra.mxu0 0.0
    %100 = vmatprep.subr.mxu0 0.0
    %101 = vmatpush1.msra.mxu0 0.0
    %102 = vmatprep.subr.mxu0 0.0
    %103 = vmatpush1.msra.mxu0 0.0
    %104 = vmatprep.subr.mxu0 0.0
    %105 = vmatpush1.msra.mxu0 0.0
    %106 = vmatprep.subr.mxu0 0.0
    %107 = vmatpush1.msra.mxu0 0.0
    %108 = vmatprep.subr.mxu0 0.0
    %109 = vmatpush1.msra.mxu0 %v70
    %110 = vmatprep.subr.mxu0 0.0
    %111 = vmatpush1.msra.mxu0 %v69
    %112 = vmatprep.subr.mxu0 0.0
    %113 = vmatpush1.msra.mxu0 %v68
    %114 = vmatprep.subr.mxu0 0.0
    %115 = vmatpush1.msra.mxu0 %v67
    %116 = vmatprep.subr.mxu0 0.0
    %117 = vmatpush2.msra.mxu0 0.0
    %118 = vmatprep.subr.mxu0 0.0
    %119 = vmatpush2.msra.mxu0 0.0
    %120 = vmatprep.subr.mxu0 0.0
    %121 = vmatpush2.msra.mxu0 0.0
    %122 = vmatprep.subr.mxu0 0.0
    %123 = vmatpush2.msra.mxu0 0.0
    %124 = vmatprep.subr.mxu0 0.0
    %125 = vmatpush2.msra.mxu0 0.0
    %126 = vmatprep.subr.mxu0 0.0
    %127 = vmatpush2.msra.mxu0 0.0
    %128 = vmatprep.subr.mxu0 0.0
    %129 = vmatpush2.msra.mxu0 0.0
    %130 = vmatprep.subr.mxu0 0.0
    %131 = vmatpush2.msra.mxu0 0.0
    %132 = vmatprep.subr.mxu0 0.0
    %133 = vmatpush2.msra.mxu0 0.0
    %134 = vmatprep.subr.mxu0 0.0
    %135 = vmatpush2.msra.mxu0 0.0
    %136 = vmatprep.subr.mxu0 0.0
    %137 = vmatpush2.msra.mxu0 0.0
    %138 = vmatprep.subr.mxu0 0.0
    %139 = vmatpush2.msra.mxu0 0.0
    %140 = vmatprep.subr.mxu0 0.0
    %141 = vmatpush2.msra.mxu0 0.0
    %142 = vmatprep.subr.mxu0 0.0
    %143 = vmatpush2.msra.mxu0 0.0
    %144 = vmatprep.subr.mxu0 0.0
    %145 = vmatpush2.msra.mxu0 0.0
    %146 = vmatprep.subr.mxu0 0.0
    %147 = vmatpush2.msra.mxu0 0.0
    %148 = vmatprep.mubr.f32.mxu0 0.0
    %149 = vmatmul.mubr.f32.gmra.mxu0 %v82
    %v150 = vpop.f32.mrf.mxu0
    %v151 = vadd.f32 %v76, %v150
    %v152 = vpop.f32.mrf.mxu0
    %153 = vdwg.mxu0
    %vm154 = vcmask 254976
    %155 = vst.msk [vmem:[%s6] sm:$0x3] %vm154, %v151
    // Predicated region
    $region30: #{image_frequency_selection.2} parent=1 // pred_check
      _
    $region31: #{image_frequency_selection.2} parent=1 // pred_check_branch
      %157 = sbr.rel (0) target = $region33
    $region32: #{image_frequency_selection.2} parent=1 // pred_region
      _
    $region33: #{image_frequency_selection.2} parent=1 // pred_fallthru
      _
    // Predicated region
    $region34: #{image_frequency_selection.2} parent=1 // pred_check
      _
    $region35: #{image_frequency_selection.2} parent=1 // pred_check_branch
      %159 = sbr.rel (0) target = $region37
    $region36: #{image_frequency_selection.2} parent=1 // pred_region
      _
    $region37: #{image_frequency_selection.2} parent=1 // pred_fallthru
      _
    %160 = vsyncpa [#allocation3], 1

</llo_original>
